<compile_context>
chip_gen: v7x
topology: tpu7x:2x2x1
jax: 0.10.0
libtpu: 0.0.40
codegen_flags: <defaults>
</compile_context>

<pallas_src>
from typing import NamedTuple

import jax
import jax.numpy as jnp
from jax import lax
from jax.experimental import pallas as pl
from jax.experimental.pallas import tpu as pltpu


def _round_up(x, m):
    return ((x + m - 1) // m) * m


class _TNDEmbedCfg(NamedTuple):
    E: int
    K: int
    Ep: int
    Kp: int
    tn: int
    tk: int
    vmem_limit: int
    is_v7: bool
    is_v5: bool


# ----------------------------------------------------------------------------
# Kernels
# ----------------------------------------------------------------------------
def _tnd_embed_kernel_single_k(x_ref, w_ref, b_ref, o_ref):
    # Fast path: the whole K reduction fits in one tile.  No f32 scratch, no
    # pl.when -- dot, add bias, cast, store.
    acc = lax.dot_general(
        x_ref[...],
        w_ref[...],
        dimension_numbers=(((1,), (1,)), ((), ())),  # contract on K (NT layout)
        preferred_element_type=jnp.float32,
    )
    o_ref[...] = (acc + b_ref[...]).astype(o_ref.dtype)


def _tnd_embed_kernel_multi_k(x_ref, w_ref, b_ref, o_ref, acc_ref):
    # General path (k-grid extent >= 2).  First step initializes the f32
    # accumulator with the dot result (no separate zero pass); middle steps
    # accumulate; the LAST step fuses acc + dot + bias + cast directly into the
    # output store, avoiding one tm x tn f32 store + reload per output tile.
    k = pl.program_id(2)
    nk = pl.num_programs(2)

    partial = lax.dot_general(
        x_ref[...],
        w_ref[...],
        dimension_numbers=(((1,), (1,)), ((), ())),
        preferred_element_type=jnp.float32,
    )

    @pl.when(k == 0)
    def _():
        acc_ref[...] = partial

    @pl.when(jnp.logical_and(k > 0, k < nk - 1))
    def _():
        acc_ref[...] += partial

    @pl.when(k == nk - 1)
    def _():
        o_ref[...] = (acc_ref[...] + partial + b_ref[...]).astype(o_ref.dtype)


# ----------------------------------------------------------------------------
# One-time parameter preparation (do NOT call per forward)
# ----------------------------------------------------------------------------
def prepare_tnd_embedding_params(weight, bias, device_kind=None):
    """Cast/pad nn.Linear params once.

    weight: (embed_dim, seq_len*num_point*input_dim)  -- stored (E, K) layout
    bias:   (embed_dim,)
    Returns (weight_bf16_padded, bias_f32_padded_row, cfg).
    """
    E, K = int(weight.shape[0]), int(weight.shape[1])

    if device_kind is None:
        try:
            device_kind = jax.devices()[0].device_kind
        except Exception:  # pragma: no cover
            device_kind = ""
    kind = device_kind.lower()
    is_v7 = ("v7" in kind) or ("7x" in kind)
    is_v5 = "v5" in kind

    # v6e/v7x MXU is 2x256x256 -> round mid-size clamps to 256; v5e (4x128x128)
    # is fine at 128.  Lane dim always a multiple of 128 (output lane-dense).
    align_n = 256 if (not is_v5 and E >= 256) else 128
    align_k = 256 if (not is_v5 and K >= 256) else 128

    tn = min(1024, _round_up(E, align_n))
    tk = min(2048, _round_up(K, align_k))
    Ep = _round_up(E, tn)
    Kp = _round_up(K, tk)

    # v5e/v6e have 128 MiB physical VMEM -> 64 MiB scoped is comfortable.
    # v7x has only 64 MiB physical -> keep the cap at 48 MiB.
    vmem_limit = (48 if is_v7 else 64) * 1024 * 1024

    # Pad (zeros keep the K reduction exact) BEFORE the bf16 cast; both happen
    # exactly once here, never in the per-call wrapper.
    w = weight
    if (Ep, Kp) != (E, K):
        w = jnp.pad(w, ((0, Ep - E), (0, Kp - K)))
    w = w.astype(jnp.bfloat16)
    # TODO(synk): optional v7x fp8 weight path (per-channel scale folded into
    # dequant) would halve the dominant HBM stream; needs accuracy validation.

    b = bias
    if Ep != E:
        b = jnp.pad(b, (0, Ep - E))
    b = b.reshape(1, Ep).astype(jnp.float32)

    cfg = _TNDEmbedCfg(E=E, K=K, Ep=Ep, Kp=Kp, tn=tn, tk=tk,
                       vmem_limit=vmem_limit, is_v7=is_v7, is_v5=is_v5)
    return w, b, cfg


# ----------------------------------------------------------------------------
# Forward
# ----------------------------------------------------------------------------
def tnd_embedding(tnd, weight_prepped, bias_prepped, cfg: _TNDEmbedCfg):
    """TNDEmbedding forward: flatten(tnd, 1, -1) @ W.T + b -> (B, embed_dim).

    Precision note: MXU operands are bf16 (f32 accumulate + f32 bias), so the
    result matches an f32 reference only at bf16-level tolerance.
    """
    B = int(tnd.shape[0])
    K = 1
    for d in tnd.shape[1:]:
        K *= int(d)
    assert K == cfg.K, f"flattened feature dim {K} != prepared weight K {cfg.K}"
    out_dtype = tnd.dtype

    # Batch tile: as large as possible (<=512) so the weight -- the dominant
    # HBM stream -- is re-read as few times as possible.  Sublane dim rounded
    # to 16 (one bf16 vreg holds 16x128).
    tm = min(512, _round_up(B, 16))
    Bp = _round_up(B, tm)

    tn, tk = cfg.tn, cfg.tk
    Ep, Kp = cfg.Ep, cfg.Kp

    # v7x megacore: make sure at least one "parallel" axis has >=2 iterations so
    # both TensorCores get work.  Halving tn keeps Ep divisible by tn.
    if cfg.is_v7 and (Bp // tm) < 2 and (Ep // tn) < 2 and tn >= 256:
        tn //= 2

    # Per-call activation prep (small vs. the weight stream).
    x = tnd.reshape(B, K)
    if (Bp, Kp) != (B, K):
        x = jnp.pad(x, ((0, Bp - B), (0, Kp - K)))
    x = x.astype(jnp.bfloat16)

    grid = (Bp // tm, Ep // tn, Kp // tk)
    single_k = grid[2] == 1

    # Advisory cost estimate: account for operand revisits (W is read once per
    # i-tile, x once per j-tile).
    out_bytes = Bp * Ep * jnp.dtype(out_dtype).itemsize
    cost = pl.CostEstimate(
        flops=2 * Bp * Kp * Ep,
        bytes_accessed=(x.size * 2 * grid[1]
                        + weight_prepped.size * 2 * grid[0]
                        + bias_prepped.size * 4
                        + out_bytes),
        transcendentals=0,
    )

    in_specs = [
        pl.BlockSpec((tm, tk), lambda i, j, k: (i, k)),   # x  (B, K)  bf16
        pl.BlockSpec((tn, tk), lambda i, j, k: (j, k)),   # W  (E, K)  bf16
        pl.BlockSpec((1, tn), lambda i, j, k: (0, j)),    # b  (1, E)  f32
    ]
    out_spec = pl.BlockSpec((tm, tn), lambda i, j, k: (i, j))

    kernel = _tnd_embed_kernel_single_k if single_k else _tnd_embed_kernel_multi_k
    scratch = [] if single_k else [pltpu.VMEM((tm, tn), jnp.float32)]

    out = pl.pallas_call(
        kernel,
        out_shape=jax.ShapeDtypeStruct((Bp, Ep), out_dtype),
        grid_spec=pltpu.PrefetchScalarGridSpec(
            num_scalar_prefetch=0,
            grid=grid,
            in_specs=in_specs,
            out_specs=out_spec,
            scratch_shapes=scratch,
        ),
        compiler_params=pltpu.CompilerParams(
            dimension_semantics=("parallel", "parallel", "arbitrary"),
            vmem_limit_bytes=cfg.vmem_limit,
        ),
        cost_estimate=cost,
    )(x, weight_prepped, bias_prepped)

    return out[:B, :cfg.E]


if __name__ == "__main__":
    # Small shapes consistent with the module's forward.
    batch = 2
    seq_len = 8
    num_point = 4
    input_dim = 4
    embed_dim = 32
    in_features = seq_len * num_point * input_dim  # 128

    key = jax.random.PRNGKey(0)
    k_x, k_w, k_b = jax.random.split(key, 3)

    # Deterministic nn.Linear-style init (uniform +-1/sqrt(in_features)).
    bound = 1.0 / (in_features ** 0.5)
    weight = jax.random.uniform(
        k_w, (embed_dim, in_features), jnp.float32, minval=-bound, maxval=bound
    )
    bias = jax.random.uniform(
        k_b, (embed_dim,), jnp.float32, minval=-bound, maxval=bound
    )
    tnd = jax.random.normal(
        k_x, (batch, seq_len, num_point, input_dim), jnp.float32
    )

    # One-time parameter prep (cast + pad of W happens here, NOT per forward).
    w_prep, b_prep, cfg = prepare_tnd_embedding_params(weight, bias)

    fwd = jax.jit(tnd_embedding, static_argnums=(3,))
    out = jax.block_until_ready(fwd(tnd, w_prep, b_prep, cfg))
    assert out.shape == (batch, embed_dim)

    x_flat = tnd.reshape(batch, -1)

    # Reference 1: precision-matched (bf16 operands, f32 accumulate + f32 bias).
    ref_bf16 = (
        jnp.dot(
            x_flat.astype(jnp.bfloat16),
            weight.astype(jnp.bfloat16).T,
            preferred_element_type=jnp.float32,
        )
        + bias
    ).astype(tnd.dtype)
    assert jnp.allclose(out, ref_bf16, atol=1e-4, rtol=1e-4)

    # Reference 2: full-f32 PyTorch-equivalent forward (bf16-level tolerance).
    ref_f32 = x_flat @ weight.T + bias
    assert jnp.allclose(out, ref_f32, atol=5e-2, rtol=5e-2)

    print("KERNEL_OK")
</pallas_src>

<mosaic_0001>
module attributes {stable_mosaic.version = 11 : i64} {
  func.func @_tnd_embed_kernel_single_k(%arg0: i32, %arg1: i32, %arg2: i32, %arg3: memref<16x128xbf16, #tpu.memory_space<vmem>>, %arg4: memref<128x128xbf16, #tpu.memory_space<vmem>>, %arg5: memref<1x128xf32, #tpu.memory_space<vmem>>, %arg6: memref<16x128xf32, #tpu.memory_space<vmem>>) attributes {dimension_semantics = [#tpu.dimension_semantics<parallel>, #tpu.dimension_semantics<parallel>, #tpu.dimension_semantics<arbitrary>], iteration_bounds = array<i64: 1, 1, 1>, scalar_prefetch = 0 : i64, scratch_operands = 0 : i64, tpu.core_type = #tpu.core_type<tc>, window_params = [{transform_indices = @transform_0, window_bounds = array<i64: 16, 128>}, {transform_indices = @transform_1, window_bounds = array<i64: 128, 128>}, {transform_indices = @transform_2, window_bounds = array<i64: 1, 128>}, {transform_indices = @transform_3, window_bounds = array<i64: 16, 128>}]} {
    %c0 = arith.constant 0 : index
    %c0_0 = arith.constant 0 : index
    %0 = vector.load %arg3[%c0, %c0_0] : memref<16x128xbf16, #tpu.memory_space<vmem>>, vector<16x128xbf16>
    %c0_1 = arith.constant 0 : index
    %c0_2 = arith.constant 0 : index
    %1 = vector.load %arg4[%c0_1, %c0_2] : memref<128x128xbf16, #tpu.memory_space<vmem>>, vector<128x128xbf16>
    %cst = arith.constant dense<0.000000e+00> : vector<16x128xf32>
    %2 = tpu.matmul %0, %1, %cst {dimension_numbers = #tpu.dot_dimension_numbers<[1], [1], [0], [0], [0, 0, 1, 0], [], []>} : vector<16x128xbf16>, vector<128x128xbf16>, vector<16x128xf32> -> vector<16x128xf32>
    %c0_3 = arith.constant 0 : index
    %c0_4 = arith.constant 0 : index
    %3 = vector.load %arg5[%c0_3, %c0_4] : memref<1x128xf32, #tpu.memory_space<vmem>>, vector<1x128xf32>
    %4 = vector.broadcast %3 : vector<1x128xf32> to vector<16x128xf32>
    %5 = arith.addf %2, %4 : vector<16x128xf32>
    %c0_5 = arith.constant 0 : index
    %c0_6 = arith.constant 0 : index
    %6 = vector.load %arg6[%c0_5, %c0_6] : memref<16x128xf32, #tpu.memory_space<vmem>>, vector<16x128xf32>
    tpu.vector_store %arg6[%c0_5, %c0_6], %5 {strides = array<i32>} : memref<16x128xf32, #tpu.memory_space<vmem>>, vector<16x128xf32>,
    return
  }
  func.func @transform_0(%arg0: i32, %arg1: i32, %arg2: i32) -> (i32, i32) {
    %c0_i32 = arith.constant 0 : i32
    return %arg0, %arg2 : i32, i32
  }
  func.func @transform_1(%arg0: i32, %arg1: i32, %arg2: i32) -> (i32, i32) {
    %c0_i32 = arith.constant 0 : i32
    return %arg1, %arg2 : i32, i32
  }
  func.func @transform_2(%arg0: i32, %arg1: i32, %arg2: i32) -> (i32, i32) {
    %c0_i32 = arith.constant 0 : i32
    %c0_i32_0 = arith.constant 0 : i32
    return %c0_i32, %arg1 : i32, i32
  }
  func.func @transform_3(%arg0: i32, %arg1: i32, %arg2: i32) -> (i32, i32) {
    %c0_i32 = arith.constant 0 : i32
    return %arg0, %arg1 : i32, i32
  }
}

</mosaic_0001>

<llo_original>
// kernel: tnd_embedding.1
$region0: #{tnd_embedding.1}
  #allocation0 [shape = 'u32[]', space=smem, size = 0x4, offset = 0x4, fixed_abs, tag = 'smem constant byte address 0x4 - core index']
  #allocation1 [shape = 'u32[144,128]{1,0:T(1,128)}', space=vmem, size = 0x12000, scoped, tag = 'internal scratch']
  %s0 = inlined_call_operand.hbm [shape: bf16[16,128], index: 0, kind: input, shape index: {}]
  %s1 = inlined_call_operand.hbm [shape: bf16[128,128], index: 1, kind: input, shape index: {}]
  %s2 = inlined_call_operand.hbm [shape: f32[1,128], index: 2, kind: input, shape index: {}]
  %s3 = inlined_call_operand.hbm [shape: f32[16,128], index: 3, kind: output, shape index: {}]
  %s4 = sld [smem:[#allocation0]]
  $region34: #{tnd_embedding.1} parent=0
    _
  %s6 = ssub.s32 1, %s4
  %s7 = scalar_select 0, %s6, %s4
  $region1: #{tnd_embedding.1} parent=0
    #allocation2 [shape = 'u8[4096]{0}', space=vmem, size = 0x1000, scoped, tag = 'input window, operand 0, single buffered']
    #allocation3 [shape = 's32[1]{0}', space=sflag, size = 0x4, scoped, tag = 'scoped memory for tnd_embedding.1']
    #allocation4 [shape = 's32[1]{0}', space=sflag, size = 0x4, scoped, tag = 'scoped memory for tnd_embedding.1']
    #allocation5 [shape = 'u8[32768]{0}', space=vmem, size = 0x8000, scoped, tag = 'input window, operand 1, single buffered']
    #allocation6 [shape = 's32[1]{0}', space=sflag, size = 0x4, scoped, tag = 'scoped memory for tnd_embedding.1']
    #allocation7 [shape = 'u8[512]{0}', space=vmem, size = 0x400, scoped, tag = 'input window, operand 2, single buffered']
    #allocation8 [shape = 'u8[8192]{0}', space=vmem, size = 0x2000, scoped, tag = 'output window, operand 0, single buffered']
    %8 = vsyncpa [#allocation3], 0
    %9 = vsyncpa [#allocation6], 0
    %10 = vsyncpa [#allocation4], 0
    // Predicated region
    $region2: #{tnd_embedding.1} parent=1 // pred_check
      _
    $region3: #{tnd_embedding.1} parent=1 // pred_check_branch
      %12 = sbr.rel (0) target = $region5
    $region4: #{tnd_embedding.1} parent=1 // pred_region
      %s14 = ssub.s32 128, 128
      %15 = vsyncadd [#allocation3], %s14
      %s16 = sshll.u32 [#allocation2], 4
      %s17 = int_to_ptr.vmem [resolvable:$true] %s16
      %22 = dma.hbm_to_vmem [thread:$0]  %s0, 128, %s17, [#allocation3], 64, 64, 4
    $region5: #{tnd_embedding.1} parent=1 // pred_fallthru
      _
    // Predicated region
    $region6: #{tnd_embedding.1} parent=1 // pred_check
      _
    $region7: #{tnd_embedding.1} parent=1 // pred_check_branch
      %24 = sbr.rel (0) target = $region9
    $region8: #{tnd_embedding.1} parent=1 // pred_region
      %s26 = ssub.s32 1024, 1024
      %27 = vsyncadd [#allocation6], %s26
      %s28 = sshll.u32 [#allocation5], 4
      %s29 = int_to_ptr.vmem [resolvable:$true] %s28
      %34 = dma.hbm_to_vmem [thread:$0]  %s1, 1024, %s29, [#allocation6], 64, 64, 4
    $region9: #{tnd_embedding.1} parent=1 // pred_fallthru
      _
    // Predicated region
    $region10: #{tnd_embedding.1} parent=1 // pred_check
      _
    $region11: #{tnd_embedding.1} parent=1 // pred_check_branch
      %36 = sbr.rel (0) target = $region13
    $region12: #{tnd_embedding.1} parent=1 // pred_region
      %s38 = ssub.s32 16, 16
      %39 = vsyncadd [#allocation6], %s38
      %s41 = sshll.u32 [#allocation7], 4
      %s42 = int_to_ptr.vmem [resolvable:$true] %s41
      %44 = dma.hbm_to_vmem [thread:$0]  %s2, 16, %s42, [#allocation6]
    $region13: #{tnd_embedding.1} parent=1 // pred_fallthru
      _
    // Predicated region
    $region14: #{tnd_embedding.1} parent=1 // pred_check
      _
    $region15: #{tnd_embedding.1} parent=1 // pred_check_branch
      %46 = sbr.rel (0) target = $region17
    $region16: #{tnd_embedding.1} parent=1 // pred_region
      %47 = dma.done [#allocation3], 128
    $region17: #{tnd_embedding.1} parent=1 // pred_fallthru
      _
    // Predicated region
    $region18: #{tnd_embedding.1} parent=1 // pred_check
      _
    $region19: #{tnd_embedding.1} parent=1 // pred_check_branch
      %49 = sbr.rel (0) target = $region21
    $region20: #{tnd_embedding.1} parent=1 // pred_region
      %50 = dma.done [#allocation6], 1024
    $region21: #{tnd_embedding.1} parent=1 // pred_fallthru
      _
    // Predicated region
    $region22: #{tnd_embedding.1} parent=1 // pred_check
      _
    $region23: #{tnd_embedding.1} parent=1 // pred_check_branch
      %52 = sbr.rel (0) target = $region25
    $region24: #{tnd_embedding.1} parent=1 // pred_region
      %53 = dma.done [#allocation6], 16
    $region25: #{tnd_embedding.1} parent=1 // pred_fallthru
      _
    %v55 = vld [vmem:[#allocation2] sm:$0xf]
    %v56 = vld [vmem:[#allocation2 + $0x4] sm:$0xf]
    %v57 = vld [vmem:[#allocation5] sm:$0xf]
    %v58 = vld [vmem:[#allocation5 + $0x4] sm:$0xf]
    %v59 = vld [vmem:[#allocation5 + $0x8] sm:$0xf]
    %v60 = vld [vmem:[#allocation5 + $0xc] sm:$0xf]
    %v61 = vld [vmem:[#allocation5 + $0x10] sm:$0xf]
    %v62 = vld [vmem:[#allocation5 + $0x14] sm:$0xf]
    %v63 = vld [vmem:[#allocation5 + $0x18] sm:$0xf]
    %v64 = vld [vmem:[#allocation5 + $0x1c] sm:$0xf]
    %v65 = vld [vmem:[#allocation5 + $0x20] sm:$0xf]
    %v66 = vld [vmem:[#allocation5 + $0x24] sm:$0xf]
    %v67 = vld [vmem:[#allocation5 + $0x28] sm:$0xf]
    %v68 = vld [vmem:[#allocation5 + $0x2c] sm:$0xf]
    %v69 = vld [vmem:[#allocation5 + $0x30] sm:$0xf]
    %v70 = vld [vmem:[#allocation5 + $0x34] sm:$0xf]
    %v71 = vld [vmem:[#allocation5 + $0x38] sm:$0xf]
    %v72 = vld [vmem:[#allocation5 + $0x3c] sm:$0xf]
    %v73 = vld [vmem:[#allocation7] sm:$0x1]
    %v75 = vlaneseq
    %v76 = vshrl.u32 %v75, 7
    %v77 = vsub.s32 0, %v76
    %v78 = vrot.slane %v73, %v77
    %v82 = vunpack.c.l.b16 %v55
    %v83 = vunpack.c.l.b16 %v56
    %v84 = vpack.c.b16 %v83, %v82
    %v102 = vunpack.c.l.b16 %v57
    %v103 = vunpack.c.l.b16 %v58
    %v104 = vunpack.c.l.b16 %v59
    %v105 = vunpack.c.l.b16 %v60
    %v106 = vunpack.c.l.b16 %v61
    %v107 = vunpack.c.l.b16 %v62
    %v108 = vunpack.c.l.b16 %v63
    %v109 = vunpack.c.l.b16 %v64
    %v110 = vunpack.c.l.b16 %v65
    %v111 = vunpack.c.l.b16 %v66
    %v112 = vunpack.c.l.b16 %v67
    %v113 = vunpack.c.l.b16 %v68
    %v114 = vunpack.c.l.b16 %v69
    %v115 = vunpack.c.l.b16 %v70
    %v116 = vunpack.c.l.b16 %v71
    %v117 = vunpack.c.l.b16 %v72
    %v118 = vpack.c.b16 %v103, %v102
    %v119 = vpack.c.b16 %v105, %v104
    %v120 = vpack.c.b16 %v107, %v106
    %v121 = vpack.c.b16 %v109, %v108
    %v122 = vpack.c.b16 %v111, %v110
    %v123 = vpack.c.b16 %v113, %v112
    %v124 = vpack.c.b16 %v115, %v114
    %v125 = vpack.c.b16 %v117, %v116
    %134 = vmatprep.subr.bf16.mxu0 0
    %135 = vmatpush1.bf16.xpose.msra.mxu0 %v118
    %136 = vmatprep.subr.bf16.mxu0 0
    %137 = vmatpush1.bf16.xpose.msra.mxu0 %v119
    %138 = vmatprep.subr.bf16.mxu0 0
    %139 = vmatpush1.bf16.xpose.msra.mxu0 %v120
    %140 = vmatprep.subr.bf16.mxu0 0
    %141 = vmatpush1.bf16.xpose.msra.mxu0 %v121
    %142 = vmatprep.subr.bf16.mxu0 0
    %143 = vmatpush1.bf16.xpose.msra.mxu0 %v122
    %144 = vmatprep.subr.bf16.mxu0 0
    %145 = vmatpush1.bf16.xpose.msra.mxu0 %v123
    %146 = vmatprep.subr.bf16.mxu0 0
    %147 = vmatpush1.bf16.xpose.msra.mxu0 %v124
    %148 = vmatprep.subr.bf16.mxu0 0
    %149 = vmatpush1.bf16.xpose.msra.mxu0 %v125
    %150 = vmatprep.subr.bf16.mxu0 0
    %151 = vmatpush1.bf16.xpose.msra.mxu0 0
    %152 = vmatprep.subr.bf16.mxu0 0
    %153 = vmatpush1.bf16.xpose.msra.mxu0 0
    %154 = vmatprep.subr.bf16.mxu0 0
    %155 = vmatpush1.bf16.xpose.msra.mxu0 0
    %156 = vmatprep.subr.bf16.mxu0 0
    %157 = vmatpush1.bf16.xpose.msra.mxu0 0
    %158 = vmatprep.subr.bf16.mxu0 0
    %159 = vmatpush1.bf16.xpose.msra.mxu0 0
    %160 = vmatprep.subr.bf16.mxu0 0
    %161 = vmatpush1.bf16.xpose.msra.mxu0 0
    %162 = vmatprep.subr.bf16.mxu0 0
    %163 = vmatpush1.bf16.xpose.msra.mxu0 0
    %164 = vmatprep.subr.bf16.mxu0 0
    %165 = vmatpush1.bf16.xpose.msra.mxu0 0
    %166 = vmatprep.mubr.bf16.mxu0 0
    %167 = vmatmul.mubr.bf16.gmra.mrb[0].mxu0 %v84
    %v168 = vpop.f32.mrb[0].mxu0
    %v169 = vadd.f32 %v78, %v168
    %v170 = vpop.f32.mrb[0].mxu0
    %v171 = vpop.f32.mrb[0].mxu0
    %v172 = vadd.f32 %v78, %v171
    %v173 = vpop.f32.mrb[0].mxu0
    %174 = vdwg.mxu0
    %175 = vst [vmem:[#allocation8] sm:$0xff] %v169
    %176 = vst [vmem:[#allocation8 + $0x8] sm:$0xff] %v172
    // Predicated region
    $region26: #{tnd_embedding.1} parent=1 // pred_check
      _
    $region27: #{tnd_embedding.1} parent=1 // pred_check_branch
      %178 = sbr.rel (0) target = $region29
    $region28: #{tnd_embedding.1} parent=1 // pred_region
      %s180 = ssub.s32 256, 256
      %181 = vsyncadd [#allocation4], %s180
      %s182 = sshll.u32 [#allocation8], 4
      %s183 = int_to_ptr.vmem [resolvable:$true] %s182
      %188 = dma.vmem_to_hbm [thread:$0]  %s183, 256, %s3, [#allocation4], 128, 128, 8
    $region29: #{tnd_embedding.1} parent=1 // pred_fallthru
      _
    // Predicated region
    $region30: #{tnd_embedding.1} parent=1 // pred_check
      _
    $region31: #{tnd_embedding.1} parent=1 // pred_check_branch
      %190 = sbr.rel (0) target = $region33
    $region32: #{tnd_embedding.1} parent=1 // pred_region
      %191 = dma.done [#allocation4], 256
    $region33: #{tnd_embedding.1} parent=1 // pred_fallthru
      _
    %192 = vsyncpa [#allocation3], 1
    %193 = vsyncpa [#allocation6], 1
    %194 = vsyncpa [#allocation4], 1

</llo_original>
